<compile_context>
chip_gen: v7x
topology: tpu7x:2x2x1
jax: 0.10.0
libtpu: 0.0.40
codegen_flags: <defaults>
</compile_context>

<pallas_src>
import functools

import jax
import jax.numpy as jnp
from jax.experimental import pallas as pl
from jax.experimental.pallas import tpu as pltpu


def _round_up(x, m):
    return ((x + m - 1) // m) * m


def _membrane_energy_kernel(x_ref, mask_ref, out_ref, *, W):
    fv = x_ref[...].astype(jnp.float32)            # (B, H*W)
    HW = fv.shape[1]
    # Central-difference neighbours via static lane rolls (XLU slot, no copies).
    # roll(x, s)[p] == x[p - s]; wrap-around positions are killed by the mask.
    h_minus = pltpu.roll(fv, W, axis=1)            # fv[h-1, w]
    h_plus = pltpu.roll(fv, HW - W, axis=1)        # fv[h+1, w]
    w_minus = pltpu.roll(fv, 1, axis=1)            # fv[h, w-1]
    w_plus = pltpu.roll(fv, HW - 1, axis=1)        # fv[h, w+1]
    dfdx = (h_plus - h_minus) * 0.5
    dfdy = (w_plus - w_minus) * 0.5
    # mask_ref: (1, H*W) interior indicator (1 where 1<=h<=H-2 and 1<=w<=W-2).
    e = (dfdx * dfdx + dfdy * dfdy) * mask_ref[...]
    partial = jnp.sum(e)                           # one reduce per (large) block
    # Lane-dense, tile-aligned partial-sum block; the wrapper reads [:, 0, 0].
    out_ref[...] = jnp.full((1, 8, 128), partial, dtype=jnp.float32)


def membrane_energy(flow, beta=1.0):
    """flow: (N, C, H, W) displacement field. Returns scalar f32 energy."""
    N, C, H, W = flow.shape
    if H <= 2 or W <= 2:
        raise ValueError("membrane_energy requires H > 2 and W > 2")
    NC = N * C
    HW = H * W
    x2d = flow.reshape(NC, HW)

    # Batch B slices per grid step: target ~4 MiB per input block (~8 MiB
    # double-buffered), comfortably inside v5e/v6e/v7x VMEM budgets.
    itemsize = jnp.dtype(flow.dtype).itemsize
    target_block_bytes = 4 * 1024 * 1024
    B = max(1, target_block_bytes // (HW * itemsize))
    B = max(8, min(int(B), 2048))
    B = (B // 8) * 8
    B = min(B, _round_up(NC, 8))
    NC_pad = _round_up(NC, B)
    if NC_pad != NC:
        # zero-padded slices have zero gradients -> contribute 0 to the sum
        x2d = jnp.pad(x2d, ((0, NC_pad - NC), (0, 0)))
    G = NC_pad // B

    # Interior mask (1 on 1<=h<=H-2, 1<=w<=W-2), flattened onto the lane axis.
    hh = jnp.arange(H)
    ww = jnp.arange(W)
    interior = ((hh[:, None] >= 1) & (hh[:, None] <= H - 2)
                & (ww[None, :] >= 1) & (ww[None, :] <= W - 2))
    mask = interior.astype(jnp.float32).reshape(1, HW)

    count = NC * (H - 2) * (W - 2)
    in_block_bytes = B * HW * itemsize
    vmem_limit = int(min(48 * 1024 * 1024,
                         max(16 * 1024 * 1024, 10 * in_block_bytes)))

    kernel = functools.partial(_membrane_energy_kernel, W=W)
    partials = pl.pallas_call(
        kernel,
        out_shape=jax.ShapeDtypeStruct((G, 8, 128), jnp.float32),
        grid_spec=pltpu.PrefetchScalarGridSpec(
            num_scalar_prefetch=0,
            grid=(G,),
            in_specs=[
                pl.BlockSpec((B, HW), lambda i: (i, 0)),
                pl.BlockSpec((1, HW), lambda i: (0, 0)),
            ],
            out_specs=pl.BlockSpec((1, 8, 128), lambda i: (i, 0, 0)),
        ),
        compiler_params=pltpu.CompilerParams(
            dimension_semantics=("parallel",),
            vmem_limit_bytes=vmem_limit,
        ),
        cost_estimate=pl.CostEstimate(
            flops=int(7 * count),
            transcendentals=0,
            bytes_accessed=int(NC_pad * HW * itemsize + HW * 4 + G * 8 * 128 * 4),
        ),
    )(x2d, mask)

    total = jnp.sum(partials[:, 0, 0])
    return total * (float(beta) / float(count))


def _membrane_energy_ref(flow, beta=1.0):
    # pure-JAX reference mirroring the PyTorch forward (dimension=2)
    dfdx = (flow[..., 2:, 1:-1] - flow[..., :-2, 1:-1]) / 2
    dfdy = (flow[..., 1:-1, 2:] - flow[..., 1:-1, :-2]) / 2
    return beta * jnp.mean(dfdx ** 2 + dfdy ** 2)


if __name__ == "__main__":
    key = jax.random.PRNGKey(0)
    # N=2 batches, C=2 displacement components (x, y), 16x16 spatial
    flow = jax.random.normal(key, (2, 2, 16, 16), dtype=jnp.float32)

    out = membrane_energy(flow, beta=1.0)
    out = jax.block_until_ready(out)

    ref = _membrane_energy_ref(flow, beta=1.0)
    assert jnp.allclose(out, ref, rtol=1e-5, atol=1e-6), (out, ref)

    print("KERNEL_OK")
</pallas_src>

<mosaic_0001>
module attributes {stable_mosaic.version = 11 : i64} {
  func.func @_membrane_energy_kernel(%arg0: i32, %arg1: memref<8x256xf32, #tpu.memory_space<vmem>>, %arg2: memref<1x256xf32, #tpu.memory_space<vmem>>, %arg3: memref<1x8x128xf32, #tpu.memory_space<vmem>>) attributes {dimension_semantics = [#tpu.dimension_semantics<parallel>], iteration_bounds = array<i64: 1>, scalar_prefetch = 0 : i64, scratch_operands = 0 : i64, tpu.core_type = #tpu.core_type<tc>, window_params = [{transform_indices = @transform_0, window_bounds = array<i64: 8, 256>}, {pipeline_mode = #tpu.pipeline_mode<synchronous>, transform_indices = @transform_1, window_bounds = array<i64: 1, 256>}, {transform_indices = @transform_2, window_bounds = array<i64: 1, 8, 128>}]} {
    %c0 = arith.constant 0 : index
    %c0_0 = arith.constant 0 : index
    %0 = vector.load %arg1[%c0, %c0_0] : memref<8x256xf32, #tpu.memory_space<vmem>>, vector<8x256xf32>
    %c16_i32 = arith.constant 16 : i32
    %1 = tpu.dynamic_rotate %0 by %c16_i32 dim 1 : vector<8x256xf32>, i32 -> vector<8x256xf32>
    %c240_i32 = arith.constant 240 : i32
    %2 = tpu.dynamic_rotate %0 by %c240_i32 dim 1 : vector<8x256xf32>, i32 -> vector<8x256xf32>
    %c1_i32 = arith.constant 1 : i32
    %3 = tpu.dynamic_rotate %0 by %c1_i32 dim 1 : vector<8x256xf32>, i32 -> vector<8x256xf32>
    %c255_i32 = arith.constant 255 : i32
    %4 = tpu.dynamic_rotate %0 by %c255_i32 dim 1 : vector<8x256xf32>, i32 -> vector<8x256xf32>
    %5 = arith.subf %2, %1 : vector<8x256xf32>
    %cst = arith.constant 5.000000e-01 : f32
    %6 = vector.broadcast %cst : f32 to vector<8x256xf32>
    %7 = arith.mulf %5, %6 : vector<8x256xf32>
    %8 = arith.subf %4, %3 : vector<8x256xf32>
    %cst_1 = arith.constant 5.000000e-01 : f32
    %9 = vector.broadcast %cst_1 : f32 to vector<8x256xf32>
    %10 = arith.mulf %8, %9 : vector<8x256xf32>
    %11 = arith.mulf %7, %7 : vector<8x256xf32>
    %12 = arith.mulf %10, %10 : vector<8x256xf32>
    %13 = arith.addf %11, %12 : vector<8x256xf32>
    %c0_2 = arith.constant 0 : index
    %c0_3 = arith.constant 0 : index
    %14 = vector.load %arg2[%c0_2, %c0_3] : memref<1x256xf32, #tpu.memory_space<vmem>>, vector<1x256xf32>
    %15 = vector.broadcast %14 : vector<1x256xf32> to vector<8x256xf32>
    %16 = arith.mulf %13, %15 : vector<8x256xf32>
    %17 = vector.shape_cast %16 : vector<8x256xf32> to vector<1x8x256xf32>
    %cst_4 = arith.constant dense<0.000000e+00> : vector<1xf32>
    %18 = vector.multi_reduction <add>, %17, %cst_4 [1, 2] : vector<1x8x256xf32> to vector<1xf32>
    %19 = vector.shape_cast %18 : vector<1xf32> to vector<1x1x1xf32>
    %20 = vector.extract %19[0, 0, 0] : f32 from vector<1x1x1xf32>
    %21 = vector.broadcast %20 : f32 to vector<1x8x128xf32>
    %c0_5 = arith.constant 0 : index
    %c0_6 = arith.constant 0 : index
    %c0_7 = arith.constant 0 : index
    %22 = vector.load %arg3[%c0_5, %c0_6, %c0_7] : memref<1x8x128xf32, #tpu.memory_space<vmem>>, vector<1x8x128xf32>
    tpu.vector_store %arg3[%c0_5, %c0_6, %c0_7], %21 {strides = array<i32>} : memref<1x8x128xf32, #tpu.memory_space<vmem>>, vector<1x8x128xf32>,
    return
  }
  func.func @transform_0(%arg0: i32) -> (i32, i32) {
    %c0_i32 = arith.constant 0 : i32
    %c0_i32_0 = arith.constant 0 : i32
    return %arg0, %c0_i32 : i32, i32
  }
  func.func @transform_1(%arg0: i32) -> (i32, i32) {
    %c0_i32 = arith.constant 0 : i32
    %c0_i32_0 = arith.constant 0 : i32
    %c0_i32_1 = arith.constant 0 : i32
    return %c0_i32, %c0_i32_0 : i32, i32
  }
  func.func @transform_2(%arg0: i32) -> (i32, i32, i32) {
    %c0_i32 = arith.constant 0 : i32
    %c0_i32_0 = arith.constant 0 : i32
    %c0_i32_1 = arith.constant 0 : i32
    return %arg0, %c0_i32, %c0_i32_0 : i32, i32, i32
  }
}

</mosaic_0001>

<llo_original>
// kernel: tpu_custom_call.1
$region0: #{tpu_custom_call.1}
  #allocation0 [shape = 'u32[]', space=smem, size = 0x4, offset = 0x4, fixed_abs, tag = 'smem constant byte address 0x4 - core index']
  #allocation1 [shape = 'u32[144,128]{1,0:T(1,128)}', space=vmem, size = 0x12000, scoped, tag = 'internal scratch']
  %s0 = inlined_call_operand.hbm [shape: f32[8,256], index: 0, kind: input, shape index: {}]
  %s1 = inlined_call_operand.vmem [shape: f32[1,256], index: 1, kind: input, shape index: {}]
  %s2 = inlined_call_operand.hbm [shape: f32[1,8,128], index: 2, kind: output, shape index: {}]
  %s3 = sld [smem:[#allocation0]]
  $region22: #{tpu_custom_call.1} parent=0
    _
  %s5 = ssub.s32 1, %s3
  %s6 = scalar_select 0, %s5, %s3
  $region1: #{tpu_custom_call.1} parent=0
    #allocation2 [shape = 'u8[8192]{0}', space=vmem, size = 0x2000, scoped, tag = 'input window, operand 0, single buffered']
    #allocation3 [shape = 's32[1]{0}', space=sflag, size = 0x4, scoped, tag = 'scoped memory for tpu_custom_call.1']
    #allocation4 [shape = 's32[1]{0}', space=sflag, size = 0x4, scoped, tag = 'scoped memory for tpu_custom_call.1']
    #allocation5 [shape = 'u8[4096]{0}', space=vmem, size = 0x1000, scoped, tag = 'output window, operand 0, single buffered']
    %7 = vsyncpa [#allocation3], 0
    %8 = vsyncpa [#allocation4], 0
    // Predicated region
    $region2: #{tpu_custom_call.1} parent=1 // pred_check
      _
    $region3: #{tpu_custom_call.1} parent=1 // pred_check_branch
      %10 = sbr.rel (0) target = $region5
    $region4: #{tpu_custom_call.1} parent=1 // pred_region
      %s12 = ssub.s32 256, 256
      %13 = vsyncadd [#allocation3], %s12
      %s15 = sshll.u32 [#allocation2], 4
      %s16 = int_to_ptr.vmem [resolvable:$true] %s15
      %18 = dma.hbm_to_vmem [thread:$0]  %s0, 256, %s16, [#allocation3]
    $region5: #{tpu_custom_call.1} parent=1 // pred_fallthru
      _
    // Predicated region
    $region6: #{tpu_custom_call.1} parent=1 // pred_check
      _
    $region7: #{tpu_custom_call.1} parent=1 // pred_check_branch
      %20 = sbr.rel (0) target = $region9
    $region8: #{tpu_custom_call.1} parent=1 // pred_region
      _
    $region9: #{tpu_custom_call.1} parent=1 // pred_fallthru
      _
    // Predicated region
    $region10: #{tpu_custom_call.1} parent=1 // pred_check
      _
    $region11: #{tpu_custom_call.1} parent=1 // pred_check_branch
      %22 = sbr.rel (0) target = $region13
    $region12: #{tpu_custom_call.1} parent=1 // pred_region
      %23 = dma.done [#allocation3], 256
    $region13: #{tpu_custom_call.1} parent=1 // pred_fallthru
      _
    %v24 = vld [vmem:[#allocation2] sm:$0xff]
    %v25 = vld [vmem:[#allocation2 + $0x8] sm:$0xff]
    %26 = vrot.lane.b32.xlu0 %v24, 16
    %v27 = vpop.permute.xlu0 %26
    %28 = vrot.lane.b32.xlu0 %v25, 16
    %v29 = vpop.permute.xlu0 %28
    %v30 = vlaneseq
    %v31 = vand.u32 %v30, 127
    %vm32 = vcmp.lt.s32.totalorder %v31, 16
    %v33 = vsel %vm32, %v27, %v29
    %v34 = vsel %vm32, %v29, %v27
    %35 = vrot.lane.b32.xlu0 %v24, 112
    %v36 = vpop.permute.xlu0 %35
    %37 = vrot.lane.b32.xlu0 %v25, 112
    %v38 = vpop.permute.xlu0 %37
    %vm39 = vcmp.lt.s32.totalorder %v31, 112
    %v40 = vsel %vm39, %v36, %v38
    %v41 = vsel %vm39, %v38, %v36
    %42 = vrot.lane.b32.xlu0 %v24, 1
    %v43 = vpop.permute.xlu0 %42
    %44 = vrot.lane.b32.xlu0 %v25, 1
    %v45 = vpop.permute.xlu0 %44
    %vm46 = vcmp.lt.s32.totalorder %v31, 1
    %v47 = vsel %vm46, %v43, %v45
    %v48 = vsel %vm46, %v45, %v43
    %49 = vrot.lane.b32.xlu0 %v24, 127
    %v50 = vpop.permute.xlu0 %49
    %51 = vrot.lane.b32.xlu0 %v25, 127
    %v52 = vpop.permute.xlu0 %51
    %vm53 = vcmp.lt.s32.totalorder %v31, 127
    %v54 = vsel %vm53, %v50, %v52
    %v55 = vsel %vm53, %v52, %v50
    %v56 = vsub.f32 %v40, %v34
    %v57 = vsub.f32 %v41, %v33
    %v58 = vmul.f32 %v56, 0.5
    %v59 = vmul.f32 %v57, 0.5
    %v60 = vsub.f32 %v54, %v48
    %v61 = vsub.f32 %v55, %v47
    %v62 = vmul.f32 %v60, 0.5
    %v63 = vmul.f32 %v61, 0.5
    %v64 = vmul.f32 %v58, %v58
    %v65 = vmul.f32 %v59, %v59
    %v66 = vmul.f32 %v62, %v62
    %v67 = vmul.f32 %v63, %v63
    %v68 = vadd.f32 %v64, %v66
    %v69 = vadd.f32 %v65, %v67
    %v70 = vld [vmem:[%s1] sm:$0x3]
    %v72 = vlaneseq
    %v73 = vshrl.u32 %v72, 7
    %v74 = vsub.s32 0, %v73
    %v75 = vrot.slane %v70, %v74
    %v76 = vlaneseq
    %v77 = vshrl.u32 %v76, 7
    %v78 = vsub.s32 1, %v77
    %v79 = vrot.slane %v70, %v78
    %v82 = vmul.f32 %v68, %v75
    %v83 = vmul.f32 %v69, %v79
    %v84 = vadd.f32 %v82, %v83
    %85 = vadd.xlane.f32.xlu0 %v84
    %v86 = vpop.xlane.xlu0 %85
    %v87 = vrot.slane %v86, 4
    %v88 = vadd.f32 %v86, %v87
    %v89 = vrot.slane %v88, 2
    %v90 = vadd.f32 %v88, %v89
    %v91 = vrot.slane %v90, 1
    %v92 = vadd.f32 %v90, %v91
    %s93 = vtos %v92
    %v94 = vstv %s93
    %95 = vst [vmem:[#allocation5] sm:$0xff] %v94
    // Predicated region
    $region14: #{tpu_custom_call.1} parent=1 // pred_check
      _
    $region15: #{tpu_custom_call.1} parent=1 // pred_check_branch
      %97 = sbr.rel (0) target = $region17
    $region16: #{tpu_custom_call.1} parent=1 // pred_region
      %s99 = ssub.s32 128, 128
      %100 = vsyncadd [#allocation4], %s99
      %s102 = sshll.u32 [#allocation5], 4
      %s103 = int_to_ptr.vmem [resolvable:$true] %s102
      %105 = dma.vmem_to_hbm [thread:$0]  %s103, 128, %s2, [#allocation4]
    $region17: #{tpu_custom_call.1} parent=1 // pred_fallthru
      _
    // Predicated region
    $region18: #{tpu_custom_call.1} parent=1 // pred_check
      _
    $region19: #{tpu_custom_call.1} parent=1 // pred_check_branch
      %107 = sbr.rel (0) target = $region21
    $region20: #{tpu_custom_call.1} parent=1 // pred_region
      %108 = dma.done [#allocation4], 128
    $region21: #{tpu_custom_call.1} parent=1 // pred_fallthru
      _
    %109 = vsyncpa [#allocation3], 1
    %110 = vsyncpa [#allocation4], 1

</llo_original>
